<compile_context>
chip_gen: v6e
topology: v6e:2x2x1
jax: 0.10.0
libtpu: 0.0.40
codegen_flags: <defaults>
</compile_context>

<pallas_src>
import functools

import jax
import jax.numpy as jnp
from jax.experimental import pallas as pl
from jax.experimental.pallas import tpu as pltpu

_LANES = 128
_CHUNK_ROWS = 32   # rows per inner-loop step: x = 4 vregs, accs = 16 vregs


def _net_kernel(params_ref, x_ref, o_ref, *, chunk, n_acc):
    # params_ref: SMEM flat (3H+1,) = [w1(0:H), b1(H:2H), w2(2H:3H), b2]
    # x_ref / o_ref: lane-dense (tile_rows, 128) f32 tiles in VMEM.
    hidden = (params_ref.shape[0] - 1) // 3
    tile_rows = x_ref.shape[0]
    n_chunks = tile_rows // chunk

    # Hoist all 3H+1 SMEM scalar reads out of the chunk loop (loop-invariant).
    w1 = [params_ref[j] for j in range(hidden)]
    b1 = [params_ref[hidden + j] for j in range(hidden)]
    w2 = [params_ref[2 * hidden + j] for j in range(hidden)]
    b2 = params_ref[3 * hidden]

    @pl.loop(0, n_chunks)
    def _(c):
        r0 = pl.multiple_of(c * chunk, chunk)
        x = x_ref[pl.ds(r0, chunk), :]
        # Multiple partial accumulators keep the EUP tanh stream and the VALU
        # slots pipelined instead of latency-bound on a single acc carry.
        accs = [jnp.zeros_like(x) for _ in range(n_acc)]
        for j in range(hidden):
            accs[j % n_acc] = accs[j % n_acc] + w2[j] * jnp.tanh(w1[j] * x + b1[j])
        total = accs[0]
        for a in accs[1:]:
            total = total + a
        o_ref[pl.ds(r0, chunk), :] = total + b2


def net_forward(x, w1, b1, w2, b2, *, max_tile_rows=1024, min_grid_steps=2):
    """x: (N,) float32. Returns (N, 1) float32, matching Net.forward."""
    n = x.shape[0]
    hidden = w1.reshape(-1).shape[0]

    # Pack all parameters into one flat f32 array for SMEM scalar prefetch.
    params = jnp.concatenate(
        [w1.reshape(-1), b1.reshape(-1), w2.reshape(-1), b2.reshape(-1)]
    ).astype(jnp.float32)

    # Lane-dense layout: N -> (rows, 128).
    rows = pl.cdiv(n, _LANES)

    # Row-chunk (vreg-resident working set); keep >= 8 for (8,128) tiling.
    if rows >= _CHUNK_ROWS:
        chunk = _CHUNK_ROWS
    else:
        chunk = max(8, pl.next_power_of_2(rows))

    # tile_rows: capped, multiple of `chunk`, and small enough that the grid
    # gets >= min_grid_steps steps when there are enough rows (v7x dual-TC).
    tile_rows = max(chunk, min(max_tile_rows, pl.cdiv(rows, min_grid_steps)))
    tile_rows = pl.cdiv(tile_rows, chunk) * chunk
    rows_p = pl.cdiv(rows, tile_rows) * tile_rows
    n_pad = rows_p * _LANES

    x_flat = x.astype(jnp.float32)
    if n_pad != n:
        # Padded rows compute garbage (sum_j w2[j]*tanh(b1[j]) + b2) and are
        # sliced away below; only the first n outputs are returned.
        x_flat = jnp.zeros((n_pad,), jnp.float32).at[:n].set(x_flat)
    x2d = x_flat.reshape(rows_p, _LANES)

    n_acc = min(4, hidden)
    kernel = functools.partial(_net_kernel, chunk=chunk, n_acc=n_acc)

    grid = (rows_p // tile_rows,)
    out = pl.pallas_call(
        kernel,
        out_shape=jax.ShapeDtypeStruct((rows_p, _LANES), jnp.float32),
        grid_spec=pltpu.PrefetchScalarGridSpec(
            num_scalar_prefetch=1,
            grid=grid,
            in_specs=[
                pl.BlockSpec((tile_rows, _LANES), lambda i, params: (i, 0)),
            ],
            out_specs=pl.BlockSpec((tile_rows, _LANES), lambda i, params: (i, 0)),
        ),
        compiler_params=pltpu.CompilerParams(
            dimension_semantics=("parallel",),
        ),
    )(params, x2d)

    if n_pad == n:
        return out.reshape(n, 1)
    return out.reshape(-1)[:n].reshape(n, 1)


def init_params(key, hidden):
    """Deterministic init mimicking nn.Linear's U(-1/sqrt(fan_in), 1/sqrt(fan_in))."""
    k1, k2, k3, k4 = jax.random.split(key, 4)
    # Linear(1 -> hidden): fan_in = 1
    bound1 = 1.0
    w1 = jax.random.uniform(k1, (1, hidden), jnp.float32, -bound1, bound1)
    b1 = jax.random.uniform(k2, (hidden,), jnp.float32, -bound1, bound1)
    # Linear(hidden -> 1): fan_in = hidden
    bound2 = 1.0 / (hidden ** 0.5)
    w2 = jax.random.uniform(k3, (hidden, 1), jnp.float32, -bound2, bound2)
    b2 = jax.random.uniform(k4, (1,), jnp.float32, -bound2, bound2)
    return w1, b1, w2, b2


if __name__ == "__main__":
    # Small, deterministic example (stands in for np.linspace(0, Lb, 1000)).
    N = 1024       # number of sample points along the beam
    HIDDEN = 32    # layers_size[0]
    Lb = 2.0       # beam length [m] (deterministic, no input())

    key = jax.random.PRNGKey(0)
    w1, b1, w2, b2 = init_params(key, HIDDEN)

    x = jnp.linspace(0.0, Lb, N, dtype=jnp.float32)

    y = net_forward(x, w1, b1, w2, b2)
    y = jax.block_until_ready(y)

    # Reference check in plain JAX (same math as the PyTorch forward).
    x2d = x.reshape(N, 1)
    h_ref = jnp.tanh(x2d @ w1 + b1.reshape(1, HIDDEN))
    y_ref = h_ref @ w2 + b2.reshape(1, 1)
    assert y.shape == (N, 1)
    assert jnp.allclose(y, y_ref, atol=1e-5, rtol=1e-5)

    print("KERNEL_OK")
</pallas_src>

<mosaic_0001>
module attributes {stable_mosaic.version = 11 : i64} {
  func.func @_net_kernel(%arg0: i32, %arg1: memref<97xf32, #tpu.memory_space<smem>>, %arg2: memref<8x128xf32, #tpu.memory_space<vmem>>, %arg3: memref<8x128xf32, #tpu.memory_space<vmem>>) attributes {dimension_semantics = [#tpu.dimension_semantics<parallel>], iteration_bounds = array<i64: 1>, scalar_prefetch = 1 : i64, scratch_operands = 0 : i64, tpu.core_type = #tpu.core_type<tc>, window_params = [{transform_indices = @transform_0, window_bounds = array<i64: 8, 128>}, {transform_indices = @transform_1, window_bounds = array<i64: 8, 128>}]} {
    %c0 = arith.constant 0 : index
    %0 = memref.load %arg1[%c0] : memref<97xf32, #tpu.memory_space<smem>>
    %c1 = arith.constant 1 : index
    %1 = memref.load %arg1[%c1] : memref<97xf32, #tpu.memory_space<smem>>
    %c2 = arith.constant 2 : index
    %2 = memref.load %arg1[%c2] : memref<97xf32, #tpu.memory_space<smem>>
    %c3 = arith.constant 3 : index
    %3 = memref.load %arg1[%c3] : memref<97xf32, #tpu.memory_space<smem>>
    %c4 = arith.constant 4 : index
    %4 = memref.load %arg1[%c4] : memref<97xf32, #tpu.memory_space<smem>>
    %c5 = arith.constant 5 : index
    %5 = memref.load %arg1[%c5] : memref<97xf32, #tpu.memory_space<smem>>
    %c6 = arith.constant 6 : index
    %6 = memref.load %arg1[%c6] : memref<97xf32, #tpu.memory_space<smem>>
    %c7 = arith.constant 7 : index
    %7 = memref.load %arg1[%c7] : memref<97xf32, #tpu.memory_space<smem>>
    %c8 = arith.constant 8 : index
    %8 = memref.load %arg1[%c8] : memref<97xf32, #tpu.memory_space<smem>>
    %c9 = arith.constant 9 : index
    %9 = memref.load %arg1[%c9] : memref<97xf32, #tpu.memory_space<smem>>
    %c10 = arith.constant 10 : index
    %10 = memref.load %arg1[%c10] : memref<97xf32, #tpu.memory_space<smem>>
    %c11 = arith.constant 11 : index
    %11 = memref.load %arg1[%c11] : memref<97xf32, #tpu.memory_space<smem>>
    %c12 = arith.constant 12 : index
    %12 = memref.load %arg1[%c12] : memref<97xf32, #tpu.memory_space<smem>>
    %c13 = arith.constant 13 : index
    %13 = memref.load %arg1[%c13] : memref<97xf32, #tpu.memory_space<smem>>
    %c14 = arith.constant 14 : index
    %14 = memref.load %arg1[%c14] : memref<97xf32, #tpu.memory_space<smem>>
    %c15 = arith.constant 15 : index
    %15 = memref.load %arg1[%c15] : memref<97xf32, #tpu.memory_space<smem>>
    %c16 = arith.constant 16 : index
    %16 = memref.load %arg1[%c16] : memref<97xf32, #tpu.memory_space<smem>>
    %c17 = arith.constant 17 : index
    %17 = memref.load %arg1[%c17] : memref<97xf32, #tpu.memory_space<smem>>
    %c18 = arith.constant 18 : index
    %18 = memref.load %arg1[%c18] : memref<97xf32, #tpu.memory_space<smem>>
    %c19 = arith.constant 19 : index
    %19 = memref.load %arg1[%c19] : memref<97xf32, #tpu.memory_space<smem>>
    %c20 = arith.constant 20 : index
    %20 = memref.load %arg1[%c20] : memref<97xf32, #tpu.memory_space<smem>>
    %c21 = arith.constant 21 : index
    %21 = memref.load %arg1[%c21] : memref<97xf32, #tpu.memory_space<smem>>
    %c22 = arith.constant 22 : index
    %22 = memref.load %arg1[%c22] : memref<97xf32, #tpu.memory_space<smem>>
    %c23 = arith.constant 23 : index
    %23 = memref.load %arg1[%c23] : memref<97xf32, #tpu.memory_space<smem>>
    %c24 = arith.constant 24 : index
    %24 = memref.load %arg1[%c24] : memref<97xf32, #tpu.memory_space<smem>>
    %c25 = arith.constant 25 : index
    %25 = memref.load %arg1[%c25] : memref<97xf32, #tpu.memory_space<smem>>
    %c26 = arith.constant 26 : index
    %26 = memref.load %arg1[%c26] : memref<97xf32, #tpu.memory_space<smem>>
    %c27 = arith.constant 27 : index
    %27 = memref.load %arg1[%c27] : memref<97xf32, #tpu.memory_space<smem>>
    %c28 = arith.constant 28 : index
    %28 = memref.load %arg1[%c28] : memref<97xf32, #tpu.memory_space<smem>>
    %c29 = arith.constant 29 : index
    %29 = memref.load %arg1[%c29] : memref<97xf32, #tpu.memory_space<smem>>
    %c30 = arith.constant 30 : index
    %30 = memref.load %arg1[%c30] : memref<97xf32, #tpu.memory_space<smem>>
    %c31 = arith.constant 31 : index
    %31 = memref.load %arg1[%c31] : memref<97xf32, #tpu.memory_space<smem>>
    %c32 = arith.constant 32 : index
    %32 = memref.load %arg1[%c32] : memref<97xf32, #tpu.memory_space<smem>>
    %c33 = arith.constant 33 : index
    %33 = memref.load %arg1[%c33] : memref<97xf32, #tpu.memory_space<smem>>
    %c34 = arith.constant 34 : index
    %34 = memref.load %arg1[%c34] : memref<97xf32, #tpu.memory_space<smem>>
    %c35 = arith.constant 35 : index
    %35 = memref.load %arg1[%c35] : memref<97xf32, #tpu.memory_space<smem>>
    %c36 = arith.constant 36 : index
    %36 = memref.load %arg1[%c36] : memref<97xf32, #tpu.memory_space<smem>>
    %c37 = arith.constant 37 : index
    %37 = memref.load %arg1[%c37] : memref<97xf32, #tpu.memory_space<smem>>
    %c38 = arith.constant 38 : index
    %38 = memref.load %arg1[%c38] : memref<97xf32, #tpu.memory_space<smem>>
    %c39 = arith.constant 39 : index
    %39 = memref.load %arg1[%c39] : memref<97xf32, #tpu.memory_space<smem>>
    %c40 = arith.constant 40 : index
    %40 = memref.load %arg1[%c40] : memref<97xf32, #tpu.memory_space<smem>>
    %c41 = arith.constant 41 : index
    %41 = memref.load %arg1[%c41] : memref<97xf32, #tpu.memory_space<smem>>
    %c42 = arith.constant 42 : index
    %42 = memref.load %arg1[%c42] : memref<97xf32, #tpu.memory_space<smem>>
    %c43 = arith.constant 43 : index
    %43 = memref.load %arg1[%c43] : memref<97xf32, #tpu.memory_space<smem>>
    %c44 = arith.constant 44 : index
    %44 = memref.load %arg1[%c44] : memref<97xf32, #tpu.memory_space<smem>>
    %c45 = arith.constant 45 : index
    %45 = memref.load %arg1[%c45] : memref<97xf32, #tpu.memory_space<smem>>
    %c46 = arith.constant 46 : index
    %46 = memref.load %arg1[%c46] : memref<97xf32, #tpu.memory_space<smem>>
    %c47 = arith.constant 47 : index
    %47 = memref.load %arg1[%c47] : memref<97xf32, #tpu.memory_space<smem>>
    %c48 = arith.constant 48 : index
    %48 = memref.load %arg1[%c48] : memref<97xf32, #tpu.memory_space<smem>>
    %c49 = arith.constant 49 : index
    %49 = memref.load %arg1[%c49] : memref<97xf32, #tpu.memory_space<smem>>
    %c50 = arith.constant 50 : index
    %50 = memref.load %arg1[%c50] : memref<97xf32, #tpu.memory_space<smem>>
    %c51 = arith.constant 51 : index
    %51 = memref.load %arg1[%c51] : memref<97xf32, #tpu.memory_space<smem>>
    %c52 = arith.constant 52 : index
    %52 = memref.load %arg1[%c52] : memref<97xf32, #tpu.memory_space<smem>>
    %c53 = arith.constant 53 : index
    %53 = memref.load %arg1[%c53] : memref<97xf32, #tpu.memory_space<smem>>
    %c54 = arith.constant 54 : index
    %54 = memref.load %arg1[%c54] : memref<97xf32, #tpu.memory_space<smem>>
    %c55 = arith.constant 55 : index
    %55 = memref.load %arg1[%c55] : memref<97xf32, #tpu.memory_space<smem>>
    %c56 = arith.constant 56 : index
    %56 = memref.load %arg1[%c56] : memref<97xf32, #tpu.memory_space<smem>>
    %c57 = arith.constant 57 : index
    %57 = memref.load %arg1[%c57] : memref<97xf32, #tpu.memory_space<smem>>
    %c58 = arith.constant 58 : index
    %58 = memref.load %arg1[%c58] : memref<97xf32, #tpu.memory_space<smem>>
    %c59 = arith.constant 59 : index
    %59 = memref.load %arg1[%c59] : memref<97xf32, #tpu.memory_space<smem>>
    %c60 = arith.constant 60 : index
    %60 = memref.load %arg1[%c60] : memref<97xf32, #tpu.memory_space<smem>>
    %c61 = arith.constant 61 : index
    %61 = memref.load %arg1[%c61] : memref<97xf32, #tpu.memory_space<smem>>
    %c62 = arith.constant 62 : index
    %62 = memref.load %arg1[%c62] : memref<97xf32, #tpu.memory_space<smem>>
    %c63 = arith.constant 63 : index
    %63 = memref.load %arg1[%c63] : memref<97xf32, #tpu.memory_space<smem>>
    %c64 = arith.constant 64 : index
    %64 = memref.load %arg1[%c64] : memref<97xf32, #tpu.memory_space<smem>>
    %c65 = arith.constant 65 : index
    %65 = memref.load %arg1[%c65] : memref<97xf32, #tpu.memory_space<smem>>
    %c66 = arith.constant 66 : index
    %66 = memref.load %arg1[%c66] : memref<97xf32, #tpu.memory_space<smem>>
    %c67 = arith.constant 67 : index
    %67 = memref.load %arg1[%c67] : memref<97xf32, #tpu.memory_space<smem>>
    %c68 = arith.constant 68 : index
    %68 = memref.load %arg1[%c68] : memref<97xf32, #tpu.memory_space<smem>>
    %c69 = arith.constant 69 : index
    %69 = memref.load %arg1[%c69] : memref<97xf32, #tpu.memory_space<smem>>
    %c70 = arith.constant 70 : index
    %70 = memref.load %arg1[%c70] : memref<97xf32, #tpu.memory_space<smem>>
    %c71 = arith.constant 71 : index
    %71 = memref.load %arg1[%c71] : memref<97xf32, #tpu.memory_space<smem>>
    %c72 = arith.constant 72 : index
    %72 = memref.load %arg1[%c72] : memref<97xf32, #tpu.memory_space<smem>>
    %c73 = arith.constant 73 : index
    %73 = memref.load %arg1[%c73] : memref<97xf32, #tpu.memory_space<smem>>
    %c74 = arith.constant 74 : index
    %74 = memref.load %arg1[%c74] : memref<97xf32, #tpu.memory_space<smem>>
    %c75 = arith.constant 75 : index
    %75 = memref.load %arg1[%c75] : memref<97xf32, #tpu.memory_space<smem>>
    %c76 = arith.constant 76 : index
    %76 = memref.load %arg1[%c76] : memref<97xf32, #tpu.memory_space<smem>>
    %c77 = arith.constant 77 : index
    %77 = memref.load %arg1[%c77] : memref<97xf32, #tpu.memory_space<smem>>
    %c78 = arith.constant 78 : index
    %78 = memref.load %arg1[%c78] : memref<97xf32, #tpu.memory_space<smem>>
    %c79 = arith.constant 79 : index
    %79 = memref.load %arg1[%c79] : memref<97xf32, #tpu.memory_space<smem>>
    %c80 = arith.constant 80 : index
    %80 = memref.load %arg1[%c80] : memref<97xf32, #tpu.memory_space<smem>>
    %c81 = arith.constant 81 : index
    %81 = memref.load %arg1[%c81] : memref<97xf32, #tpu.memory_space<smem>>
    %c82 = arith.constant 82 : index
    %82 = memref.load %arg1[%c82] : memref<97xf32, #tpu.memory_space<smem>>
    %c83 = arith.constant 83 : index
    %83 = memref.load %arg1[%c83] : memref<97xf32, #tpu.memory_space<smem>>
    %c84 = arith.constant 84 : index
    %84 = memref.load %arg1[%c84] : memref<97xf32, #tpu.memory_space<smem>>
    %c85 = arith.constant 85 : index
    %85 = memref.load %arg1[%c85] : memref<97xf32, #tpu.memory_space<smem>>
    %c86 = arith.constant 86 : index
    %86 = memref.load %arg1[%c86] : memref<97xf32, #tpu.memory_space<smem>>
    %c87 = arith.constant 87 : index
    %87 = memref.load %arg1[%c87] : memref<97xf32, #tpu.memory_space<smem>>
    %c88 = arith.constant 88 : index
    %88 = memref.load %arg1[%c88] : memref<97xf32, #tpu.memory_space<smem>>
    %c89 = arith.constant 89 : index
    %89 = memref.load %arg1[%c89] : memref<97xf32, #tpu.memory_space<smem>>
    %c90 = arith.constant 90 : index
    %90 = memref.load %arg1[%c90] : memref<97xf32, #tpu.memory_space<smem>>
    %c91 = arith.constant 91 : index
    %91 = memref.load %arg1[%c91] : memref<97xf32, #tpu.memory_space<smem>>
    %c92 = arith.constant 92 : index
    %92 = memref.load %arg1[%c92] : memref<97xf32, #tpu.memory_space<smem>>
    %c93 = arith.constant 93 : index
    %93 = memref.load %arg1[%c93] : memref<97xf32, #tpu.memory_space<smem>>
    %c94 = arith.constant 94 : index
    %94 = memref.load %arg1[%c94] : memref<97xf32, #tpu.memory_space<smem>>
    %c95 = arith.constant 95 : index
    %95 = memref.load %arg1[%c95] : memref<97xf32, #tpu.memory_space<smem>>
    %c96 = arith.constant 96 : index
    %96 = memref.load %arg1[%c96] : memref<97xf32, #tpu.memory_space<smem>>
    %c0_i32 = arith.constant 0 : i32
    %c1_i32 = arith.constant 1 : i32
    %97 = arith.muli %c0_i32, %c1_i32 : i32
    %c0_i32_0 = arith.constant 0 : i32
    %98 = arith.addi %c0_i32_0, %97 : i32
    %c8_i32 = arith.constant 8 : i32
    %99 = arith.muli %98, %c8_i32 : i32
    %100 = tpu.assume_multiple %99, 8 : i32
    %101 = arith.index_cast %100 : i32 to index
    %c0_1 = arith.constant 0 : index
    %102 = vector.load %arg2[%101, %c0_1] : memref<8x128xf32, #tpu.memory_space<vmem>>, vector<8x128xf32>
    %cst = arith.constant 0.000000e+00 : f32
    %103 = vector.broadcast %cst : f32 to vector<8x128xf32>
    %cst_2 = arith.constant 0.000000e+00 : f32
    %104 = vector.broadcast %cst_2 : f32 to vector<8x128xf32>
    %cst_3 = arith.constant 0.000000e+00 : f32
    %105 = vector.broadcast %cst_3 : f32 to vector<8x128xf32>
    %cst_4 = arith.constant 0.000000e+00 : f32
    %106 = vector.broadcast %cst_4 : f32 to vector<8x128xf32>
    %107 = vector.broadcast %0 : f32 to vector<8x128xf32>
    %108 = arith.mulf %107, %102 : vector<8x128xf32>
    %109 = vector.broadcast %32 : f32 to vector<8x128xf32>
    %110 = arith.addf %108, %109 : vector<8x128xf32>
    %111 = math.tanh %110 : vector<8x128xf32>
    %112 = vector.broadcast %64 : f32 to vector<8x128xf32>
    %113 = arith.mulf %112, %111 : vector<8x128xf32>
    %114 = arith.addf %103, %113 : vector<8x128xf32>
    %115 = vector.broadcast %1 : f32 to vector<8x128xf32>
    %116 = arith.mulf %115, %102 : vector<8x128xf32>
    %117 = vector.broadcast %33 : f32 to vector<8x128xf32>
    %118 = arith.addf %116, %117 : vector<8x128xf32>
    %119 = math.tanh %118 : vector<8x128xf32>
    %120 = vector.broadcast %65 : f32 to vector<8x128xf32>
    %121 = arith.mulf %120, %119 : vector<8x128xf32>
    %122 = arith.addf %104, %121 : vector<8x128xf32>
    %123 = vector.broadcast %2 : f32 to vector<8x128xf32>
    %124 = arith.mulf %123, %102 : vector<8x128xf32>
    %125 = vector.broadcast %34 : f32 to vector<8x128xf32>
    %126 = arith.addf %124, %125 : vector<8x128xf32>
    %127 = math.tanh %126 : vector<8x128xf32>
    %128 = vector.broadcast %66 : f32 to vector<8x128xf32>
    %129 = arith.mulf %128, %127 : vector<8x128xf32>
    %130 = arith.addf %105, %129 : vector<8x128xf32>
    %131 = vector.broadcast %3 : f32 to vector<8x128xf32>
    %132 = arith.mulf %131, %102 : vector<8x128xf32>
    %133 = vector.broadcast %35 : f32 to vector<8x128xf32>
    %134 = arith.addf %132, %133 : vector<8x128xf32>
    %135 = math.tanh %134 : vector<8x128xf32>
    %136 = vector.broadcast %67 : f32 to vector<8x128xf32>
    %137 = arith.mulf %136, %135 : vector<8x128xf32>
    %138 = arith.addf %106, %137 : vector<8x128xf32>
    %139 = vector.broadcast %4 : f32 to vector<8x128xf32>
    %140 = arith.mulf %139, %102 : vector<8x128xf32>
    %141 = vector.broadcast %36 : f32 to vector<8x128xf32>
    %142 = arith.addf %140, %141 : vector<8x128xf32>
    %143 = math.tanh %142 : vector<8x128xf32>
    %144 = vector.broadcast %68 : f32 to vector<8x128xf32>
    %145 = arith.mulf %144, %143 : vector<8x128xf32>
    %146 = arith.addf %114, %145 : vector<8x128xf32>
    %147 = vector.broadcast %5 : f32 to vector<8x128xf32>
    %148 = arith.mulf %147, %102 : vector<8x128xf32>
    %149 = vector.broadcast %37 : f32 to vector<8x128xf32>
    %150 = arith.addf %148, %149 : vector<8x128xf32>
    %151 = math.tanh %150 : vector<8x128xf32>
    %152 = vector.broadcast %69 : f32 to vector<8x128xf32>
    %153 = arith.mulf %152, %151 : vector<8x128xf32>
    %154 = arith.addf %122, %153 : vector<8x128xf32>
    %155 = vector.broadcast %6 : f32 to vector<8x128xf32>
    %156 = arith.mulf %155, %102 : vector<8x128xf32>
    %157 = vector.broadcast %38 : f32 to vector<8x128xf32>
    %158 = arith.addf %156, %157 : vector<8x128xf32>
    %159 = math.tanh %158 : vector<8x128xf32>
    %160 = vector.broadcast %70 : f32 to vector<8x128xf32>
    %161 = arith.mulf %160, %159 : vector<8x128xf32>
    %162 = arith.addf %130, %161 : vector<8x128xf32>
    %163 = vector.broadcast %7 : f32 to vector<8x128xf32>
    %164 = arith.mulf %163, %102 : vector<8x128xf32>
    %165 = vector.broadcast %39 : f32 to vector<8x128xf32>
    %166 = arith.addf %164, %165 : vector<8x128xf32>
    %167 = math.tanh %166 : vector<8x128xf32>
    %168 = vector.broadcast %71 : f32 to vector<8x128xf32>
    %169 = arith.mulf %168, %167 : vector<8x128xf32>
    %170 = arith.addf %138, %169 : vector<8x128xf32>
    %171 = vector.broadcast %8 : f32 to vector<8x128xf32>
    %172 = arith.mulf %171, %102 : vector<8x128xf32>
    %173 = vector.broadcast %40 : f32 to vector<8x128xf32>
    %174 = arith.addf %172, %173 : vector<8x128xf32>
    %175 = math.tanh %174 : vector<8x128xf32>
    %176 = vector.broadcast %72 : f32 to vector<8x128xf32>
    %177 = arith.mulf %176, %175 : vector<8x128xf32>
    %178 = arith.addf %146, %177 : vector<8x128xf32>
    %179 = vector.broadcast %9 : f32 to vector<8x128xf32>
    %180 = arith.mulf %179, %102 : vector<8x128xf32>
    %181 = vector.broadcast %41 : f32 to vector<8x128xf32>
    %182 = arith.addf %180, %181 : vector<8x128xf32>
    %183 = math.tanh %182 : vector<8x128xf32>
    %184 = vector.broadcast %73 : f32 to vector<8x128xf32>
    %185 = arith.mulf %184, %183 : vector<8x128xf32>
    %186 = arith.addf %154, %185 : vector<8x128xf32>
    %187 = vector.broadcast %10 : f32 to vector<8x128xf32>
    %188 = arith.mulf %187, %102 : vector<8x128xf32>
    %189 = vector.broadcast %42 : f32 to vector<8x128xf32>
    %190 = arith.addf %188, %189 : vector<8x128xf32>
    %191 = math.tanh %190 : vector<8x128xf32>
    %192 = vector.broadcast %74 : f32 to vector<8x128xf32>
    %193 = arith.mulf %192, %191 : vector<8x128xf32>
    %194 = arith.addf %162, %193 : vector<8x128xf32>
    %195 = vector.broadcast %11 : f32 to vector<8x128xf32>
    %196 = arith.mulf %195, %102 : vector<8x128xf32>
    %197 = vector.broadcast %43 : f32 to vector<8x128xf32>
    %198 = arith.addf %196, %197 : vector<8x128xf32>
    %199 = math.tanh %198 : vector<8x128xf32>
    %200 = vector.broadcast %75 : f32 to vector<8x128xf32>
    %201 = arith.mulf %200, %199 : vector<8x128xf32>
    %202 = arith.addf %170, %201 : vector<8x128xf32>
    %203 = vector.broadcast %12 : f32 to vector<8x128xf32>
    %204 = arith.mulf %203, %102 : vector<8x128xf32>
    %205 = vector.broadcast %44 : f32 to vector<8x128xf32>
    %206 = arith.addf %204, %205 : vector<8x128xf32>
    %207 = math.tanh %206 : vector<8x128xf32>
    %208 = vector.broadcast %76 : f32 to vector<8x128xf32>
    %209 = arith.mulf %208, %207 : vector<8x128xf32>
    %210 = arith.addf %178, %209 : vector<8x128xf32>
    %211 = vector.broadcast %13 : f32 to vector<8x128xf32>
    %212 = arith.mulf %211, %102 : vector<8x128xf32>
    %213 = vector.broadcast %45 : f32 to vector<8x128xf32>
    %214 = arith.addf %212, %213 : vector<8x128xf32>
    %215 = math.tanh %214 : vector<8x128xf32>
    %216 = vector.broadcast %77 : f32 to vector<8x128xf32>
    %217 = arith.mulf %216, %215 : vector<8x128xf32>
    %218 = arith.addf %186, %217 : vector<8x128xf32>
    %219 = vector.broadcast %14 : f32 to vector<8x128xf32>
    %220 = arith.mulf %219, %102 : vector<8x128xf32>
    %221 = vector.broadcast %46 : f32 to vector<8x128xf32>
    %222 = arith.addf %220, %221 : vector<8x128xf32>
    %223 = math.tanh %222 : vector<8x128xf32>
    %224 = vector.broadcast %78 : f32 to vector<8x128xf32>
    %225 = arith.mulf %224, %223 : vector<8x128xf32>
    %226 = arith.addf %194, %225 : vector<8x128xf32>
    %227 = vector.broadcast %15 : f32 to vector<8x128xf32>
    %228 = arith.mulf %227, %102 : vector<8x128xf32>
    %229 = vector.broadcast %47 : f32 to vector<8x128xf32>
    %230 = arith.addf %228, %229 : vector<8x128xf32>
    %231 = math.tanh %230 : vector<8x128xf32>
    %232 = vector.broadcast %79 : f32 to vector<8x128xf32>
    %233 = arith.mulf %232, %231 : vector<8x128xf32>
    %234 = arith.addf %202, %233 : vector<8x128xf32>
    %235 = vector.broadcast %16 : f32 to vector<8x128xf32>
    %236 = arith.mulf %235, %102 : vector<8x128xf32>
    %237 = vector.broadcast %48 : f32 to vector<8x128xf32>
    %238 = arith.addf %236, %237 : vector<8x128xf32>
    %239 = math.tanh %238 : vector<8x128xf32>
    %240 = vector.broadcast %80 : f32 to vector<8x128xf32>
    %241 = arith.mulf %240, %239 : vector<8x128xf32>
    %242 = arith.addf %210, %241 : vector<8x128xf32>
    %243 = vector.broadcast %17 : f32 to vector<8x128xf32>
    %244 = arith.mulf %243, %102 : vector<8x128xf32>
    %245 = vector.broadcast %49 : f32 to vector<8x128xf32>
    %246 = arith.addf %244, %245 : vector<8x128xf32>
    %247 = math.tanh %246 : vector<8x128xf32>
    %248 = vector.broadcast %81 : f32 to vector<8x128xf32>
    %249 = arith.mulf %248, %247 : vector<8x128xf32>
    %250 = arith.addf %218, %249 : vector<8x128xf32>
    %251 = vector.broadcast %18 : f32 to vector<8x128xf32>
    %252 = arith.mulf %251, %102 : vector<8x128xf32>
    %253 = vector.broadcast %50 : f32 to vector<8x128xf32>
    %254 = arith.addf %252, %253 : vector<8x128xf32>
    %255 = math.tanh %254 : vector<8x128xf32>
    %256 = vector.broadcast %82 : f32 to vector<8x128xf32>
    %257 = arith.mulf %256, %255 : vector<8x128xf32>
    %258 = arith.addf %226, %257 : vector<8x128xf32>
    %259 = vector.broadcast %19 : f32 to vector<8x128xf32>
    %260 = arith.mulf %259, %102 : vector<8x128xf32>
    %261 = vector.broadcast %51 : f32 to vector<8x128xf32>
    %262 = arith.addf %260, %261 : vector<8x128xf32>
    %263 = math.tanh %262 : vector<8x128xf32>
    %264 = vector.broadcast %83 : f32 to vector<8x128xf32>
    %265 = arith.mulf %264, %263 : vector<8x128xf32>
    %266 = arith.addf %234, %265 : vector<8x128xf32>
    %267 = vector.broadcast %20 : f32 to vector<8x128xf32>
    %268 = arith.mulf %267, %102 : vector<8x128xf32>
    %269 = vector.broadcast %52 : f32 to vector<8x128xf32>
    %270 = arith.addf %268, %269 : vector<8x128xf32>
    %271 = math.tanh %270 : vector<8x128xf32>
    %272 = vector.broadcast %84 : f32 to vector<8x128xf32>
    %273 = arith.mulf %272, %271 : vector<8x128xf32>
    %274 = arith.addf %242, %273 : vector<8x128xf32>
    %275 = vector.broadcast %21 : f32 to vector<8x128xf32>
    %276 = arith.mulf %275, %102 : vector<8x128xf32>
    %277 = vector.broadcast %53 : f32 to vector<8x128xf32>
    %278 = arith.addf %276, %277 : vector<8x128xf32>
    %279 = math.tanh %278 : vector<8x128xf32>
    %280 = vector.broadcast %85 : f32 to vector<8x128xf32>
    %281 = arith.mulf %280, %279 : vector<8x128xf32>
    %282 = arith.addf %250, %281 : vector<8x128xf32>
    %283 = vector.broadcast %22 : f32 to vector<8x128xf32>
    %284 = arith.mulf %283, %102 : vector<8x128xf32>
    %285 = vector.broadcast %54 : f32 to vector<8x128xf32>
    %286 = arith.addf %284, %285 : vector<8x128xf32>
    %287 = math.tanh %286 : vector<8x128xf32>
    %288 = vector.broadcast %86 : f32 to vector<8x128xf32>
    %289 = arith.mulf %288, %287 : vector<8x128xf32>
    %290 = arith.addf %258, %289 : vector<8x128xf32>
    %291 = vector.broadcast %23 : f32 to vector<8x128xf32>
    %292 = arith.mulf %291, %102 : vector<8x128xf32>
    %293 = vector.broadcast %55 : f32 to vector<8x128xf32>
    %294 = arith.addf %292, %293 : vector<8x128xf32>
    %295 = math.tanh %294 : vector<8x128xf32>
    %296 = vector.broadcast %87 : f32 to vector<8x128xf32>
    %297 = arith.mulf %296, %295 : vector<8x128xf32>
    %298 = arith.addf %266, %297 : vector<8x128xf32>
    %299 = vector.broadcast %24 : f32 to vector<8x128xf32>
    %300 = arith.mulf %299, %102 : vector<8x128xf32>
    %301 = vector.broadcast %56 : f32 to vector<8x128xf32>
    %302 = arith.addf %300, %301 : vector<8x128xf32>
    %303 = math.tanh %302 : vector<8x128xf32>
    %304 = vector.broadcast %88 : f32 to vector<8x128xf32>
    %305 = arith.mulf %304, %303 : vector<8x128xf32>
    %306 = arith.addf %274, %305 : vector<8x128xf32>
    %307 = vector.broadcast %25 : f32 to vector<8x128xf32>
    %308 = arith.mulf %307, %102 : vector<8x128xf32>
    %309 = vector.broadcast %57 : f32 to vector<8x128xf32>
    %310 = arith.addf %308, %309 : vector<8x128xf32>
    %311 = math.tanh %310 : vector<8x128xf32>
    %312 = vector.broadcast %89 : f32 to vector<8x128xf32>
    %313 = arith.mulf %312, %311 : vector<8x128xf32>
    %314 = arith.addf %282, %313 : vector<8x128xf32>
    %315 = vector.broadcast %26 : f32 to vector<8x128xf32>
    %316 = arith.mulf %315, %102 : vector<8x128xf32>
    %317 = vector.broadcast %58 : f32 to vector<8x128xf32>
    %318 = arith.addf %316, %317 : vector<8x128xf32>
    %319 = math.tanh %318 : vector<8x128xf32>
    %320 = vector.broadcast %90 : f32 to vector<8x128xf32>
    %321 = arith.mulf %320, %319 : vector<8x128xf32>
    %322 = arith.addf %290, %321 : vector<8x128xf32>
    %323 = vector.broadcast %27 : f32 to vector<8x128xf32>
    %324 = arith.mulf %323, %102 : vector<8x128xf32>
    %325 = vector.broadcast %59 : f32 to vector<8x128xf32>
    %326 = arith.addf %324, %325 : vector<8x128xf32>
    %327 = math.tanh %326 : vector<8x128xf32>
    %328 = vector.broadcast %91 : f32 to vector<8x128xf32>
    %329 = arith.mulf %328, %327 : vector<8x128xf32>
    %330 = arith.addf %298, %329 : vector<8x128xf32>
    %331 = vector.broadcast %28 : f32 to vector<8x128xf32>
    %332 = arith.mulf %331, %102 : vector<8x128xf32>
    %333 = vector.broadcast %60 : f32 to vector<8x128xf32>
    %334 = arith.addf %332, %333 : vector<8x128xf32>
    %335 = math.tanh %334 : vector<8x128xf32>
    %336 = vector.broadcast %92 : f32 to vector<8x128xf32>
    %337 = arith.mulf %336, %335 : vector<8x128xf32>
    %338 = arith.addf %306, %337 : vector<8x128xf32>
    %339 = vector.broadcast %29 : f32 to vector<8x128xf32>
    %340 = arith.mulf %339, %102 : vector<8x128xf32>
    %341 = vector.broadcast %61 : f32 to vector<8x128xf32>
    %342 = arith.addf %340, %341 : vector<8x128xf32>
    %343 = math.tanh %342 : vector<8x128xf32>
    %344 = vector.broadcast %93 : f32 to vector<8x128xf32>
    %345 = arith.mulf %344, %343 : vector<8x128xf32>
    %346 = arith.addf %314, %345 : vector<8x128xf32>
    %347 = vector.broadcast %30 : f32 to vector<8x128xf32>
    %348 = arith.mulf %347, %102 : vector<8x128xf32>
    %349 = vector.broadcast %62 : f32 to vector<8x128xf32>
    %350 = arith.addf %348, %349 : vector<8x128xf32>
    %351 = math.tanh %350 : vector<8x128xf32>
    %352 = vector.broadcast %94 : f32 to vector<8x128xf32>
    %353 = arith.mulf %352, %351 : vector<8x128xf32>
    %354 = arith.addf %322, %353 : vector<8x128xf32>
    %355 = vector.broadcast %31 : f32 to vector<8x128xf32>
    %356 = arith.mulf %355, %102 : vector<8x128xf32>
    %357 = vector.broadcast %63 : f32 to vector<8x128xf32>
    %358 = arith.addf %356, %357 : vector<8x128xf32>
    %359 = math.tanh %358 : vector<8x128xf32>
    %360 = vector.broadcast %95 : f32 to vector<8x128xf32>
    %361 = arith.mulf %360, %359 : vector<8x128xf32>
    %362 = arith.addf %330, %361 : vector<8x128xf32>
    %363 = arith.addf %338, %346 : vector<8x128xf32>
    %364 = arith.addf %363, %354 : vector<8x128xf32>
    %365 = arith.addf %364, %362 : vector<8x128xf32>
    %366 = vector.broadcast %96 : f32 to vector<8x128xf32>
    %367 = arith.addf %365, %366 : vector<8x128xf32>
    %368 = arith.index_cast %100 : i32 to index
    %c0_5 = arith.constant 0 : index
    %369 = vector.load %arg3[%368, %c0_5] : memref<8x128xf32, #tpu.memory_space<vmem>>, vector<8x128xf32>
    tpu.vector_store %arg3[%368, %c0_5], %367 {strides = array<i32>} : memref<8x128xf32, #tpu.memory_space<vmem>>, vector<8x128xf32>,
    %c1_i32_6 = arith.constant 1 : i32
    return
  }
  func.func @transform_0(%arg0: i32, %arg1: memref<97xf32, #tpu.memory_space<smem>>) -> (i32, i32) {
    %c0_i32 = arith.constant 0 : i32
    %c0_i32_0 = arith.constant 0 : i32
    return %arg0, %c0_i32 : i32, i32
  }
  func.func @transform_1(%arg0: i32, %arg1: memref<97xf32, #tpu.memory_space<smem>>) -> (i32, i32) {
    %c0_i32 = arith.constant 0 : i32
    %c0_i32_0 = arith.constant 0 : i32
    return %arg0, %c0_i32 : i32, i32
  }
}

</mosaic_0001>

<llo_original>
// kernel: tpu_custom_call.1
$region0: #{tpu_custom_call.1}
  #allocation0 [shape = 'u32[]', space=smem, size = 0x4, offset = 0x4, fixed_abs, tag = 'smem constant byte address 0x4 - core index']
  #allocation1 [shape = 'u32[144,128]{1,0:T(1,128)}', space=vmem, size = 0x12000, scoped, tag = 'internal scratch']
  #allocation2 [shape = 's32[1]{0}', space=sflag, size = 0x4, scoped, tag = 'scoped memory for tpu_custom_call.1']
  #allocation3 [shape = 'u8[512]{0}', space=smem, size = 0x200, scoped, tag = 'prefetched SMEM operand 0']
  %s0 = inlined_call_operand.hbm [shape: f32[97], index: 0, kind: input, shape index: {}]
  %s1 = inlined_call_operand.hbm [shape: f32[8,128], index: 1, kind: input, shape index: {}]
  %s2 = inlined_call_operand.hbm [shape: f32[8,128], index: 2, kind: output, shape index: {}]
  %s3 = sld [smem:[#allocation0]]
  $region18: #{tpu_custom_call.1} parent=0
    _
  %s5 = ssub.s32 1, %s3
  %s6 = scalar_select 0, %s5, %s3
  %8 = dma.hbm_to_smem %s0, 16, [#allocation3], [#allocation2]
  %9 = dma.done [#allocation2], 16
  %10 = sfence
  $region1: #{tpu_custom_call.1} parent=0
    #allocation4 [shape = 'u8[4096]{0}', space=vmem, size = 0x1000, scoped, tag = 'input window, operand 1, single buffered']
    #allocation5 [shape = 's32[1]{0}', space=sflag, size = 0x4, scoped, tag = 'scoped memory for tpu_custom_call.1']
    #allocation6 [shape = 's32[1]{0}', space=sflag, size = 0x4, scoped, tag = 'scoped memory for tpu_custom_call.1']
    #allocation7 [shape = 'u8[4096]{0}', space=vmem, size = 0x1000, scoped, tag = 'output window, operand 0, single buffered']
    %11 = vsyncpa [#allocation5], 0
    %12 = vsyncpa [#allocation6], 0
    // Predicated region
    $region2: #{tpu_custom_call.1} parent=1 // pred_check
      _
    $region3: #{tpu_custom_call.1} parent=1 // pred_check_branch
      %14 = sbr.rel (0) target = $region5
    $region4: #{tpu_custom_call.1} parent=1 // pred_region
      %s16 = ssub.s32 128, 128
      %17 = vsyncadd [#allocation5], %s16
      %s19 = sshll.u32 [#allocation4], 4
      %s20 = int_to_ptr.vmem [resolvable:$true] %s19
      %22 = dma.hbm_to_vmem [thread:$0]  %s1, 128, %s20, [#allocation5]
    $region5: #{tpu_custom_call.1} parent=1 // pred_fallthru
      _
    // Predicated region
    $region6: #{tpu_custom_call.1} parent=1 // pred_check
      _
    $region7: #{tpu_custom_call.1} parent=1 // pred_check_branch
      %24 = sbr.rel (0) target = $region9
    $region8: #{tpu_custom_call.1} parent=1 // pred_region
      %25 = dma.done [#allocation5], 128
    $region9: #{tpu_custom_call.1} parent=1 // pred_fallthru
      _
    %s26 = sld [smem:[#allocation3]]
    %s27 = sld [smem:[#allocation3 + $0x1]]
    %s28 = sld [smem:[#allocation3 + $0x2]]
    %s29 = sld [smem:[#allocation3 + $0x3]]
    %s30 = sld [smem:[#allocation3 + $0x4]]
    %s31 = sld [smem:[#allocation3 + $0x5]]
    %s32 = sld [smem:[#allocation3 + $0x6]]
    %s33 = sld [smem:[#allocation3 + $0x7]]
    %s34 = sld [smem:[#allocation3 + $0x8]]
    %s35 = sld [smem:[#allocation3 + $0x9]]
    %s36 = sld [smem:[#allocation3 + $0xa]]
    %s37 = sld [smem:[#allocation3 + $0xb]]
    %s38 = sld [smem:[#allocation3 + $0xc]]
    %s39 = sld [smem:[#allocation3 + $0xd]]
    %s40 = sld [smem:[#allocation3 + $0xe]]
    %s41 = sld [smem:[#allocation3 + $0xf]]
    %s42 = sld [smem:[#allocation3 + $0x10]]
    %s43 = sld [smem:[#allocation3 + $0x11]]
    %s44 = sld [smem:[#allocation3 + $0x12]]
    %s45 = sld [smem:[#allocation3 + $0x13]]
    %s46 = sld [smem:[#allocation3 + $0x14]]
    %s47 = sld [smem:[#allocation3 + $0x15]]
    %s48 = sld [smem:[#allocation3 + $0x16]]
    %s49 = sld [smem:[#allocation3 + $0x17]]
    %s50 = sld [smem:[#allocation3 + $0x18]]
    %s51 = sld [smem:[#allocation3 + $0x19]]
    %s52 = sld [smem:[#allocation3 + $0x1a]]
    %s53 = sld [smem:[#allocation3 + $0x1b]]
    %s54 = sld [smem:[#allocation3 + $0x1c]]
    %s55 = sld [smem:[#allocation3 + $0x1d]]
    %s56 = sld [smem:[#allocation3 + $0x1e]]
    %s57 = sld [smem:[#allocation3 + $0x1f]]
    %s58 = sld [smem:[#allocation3 + $0x20]]
    %s59 = sld [smem:[#allocation3 + $0x21]]
    %s60 = sld [smem:[#allocation3 + $0x22]]
    %s61 = sld [smem:[#allocation3 + $0x23]]
    %s62 = sld [smem:[#allocation3 + $0x24]]
    %s63 = sld [smem:[#allocation3 + $0x25]]
    %s64 = sld [smem:[#allocation3 + $0x26]]
    %s65 = sld [smem:[#allocation3 + $0x27]]
    %s66 = sld [smem:[#allocation3 + $0x28]]
    %s67 = sld [smem:[#allocation3 + $0x29]]
    %s68 = sld [smem:[#allocation3 + $0x2a]]
    %s69 = sld [smem:[#allocation3 + $0x2b]]
    %s70 = sld [smem:[#allocation3 + $0x2c]]
    %s71 = sld [smem:[#allocation3 + $0x2d]]
    %s72 = sld [smem:[#allocation3 + $0x2e]]
    %s73 = sld [smem:[#allocation3 + $0x2f]]
    %s74 = sld [smem:[#allocation3 + $0x30]]
    %s75 = sld [smem:[#allocation3 + $0x31]]
    %s76 = sld [smem:[#allocation3 + $0x32]]
    %s77 = sld [smem:[#allocation3 + $0x33]]
    %s78 = sld [smem:[#allocation3 + $0x34]]
    %s79 = sld [smem:[#allocation3 + $0x35]]
    %s80 = sld [smem:[#allocation3 + $0x36]]
    %s81 = sld [smem:[#allocation3 + $0x37]]
    %s82 = sld [smem:[#allocation3 + $0x38]]
    %s83 = sld [smem:[#allocation3 + $0x39]]
    %s84 = sld [smem:[#allocation3 + $0x3a]]
    %s85 = sld [smem:[#allocation3 + $0x3b]]
    %s86 = sld [smem:[#allocation3 + $0x3c]]
    %s87 = sld [smem:[#allocation3 + $0x3d]]
    %s88 = sld [smem:[#allocation3 + $0x3e]]
    %s89 = sld [smem:[#allocation3 + $0x3f]]
    %s90 = sld [smem:[#allocation3 + $0x40]]
    %s91 = sld [smem:[#allocation3 + $0x41]]
    %s92 = sld [smem:[#allocation3 + $0x42]]
    %s93 = sld [smem:[#allocation3 + $0x43]]
    %s94 = sld [smem:[#allocation3 + $0x44]]
    %s95 = sld [smem:[#allocation3 + $0x45]]
    %s96 = sld [smem:[#allocation3 + $0x46]]
    %s97 = sld [smem:[#allocation3 + $0x47]]
    %s98 = sld [smem:[#allocation3 + $0x48]]
    %s99 = sld [smem:[#allocation3 + $0x49]]
    %s100 = sld [smem:[#allocation3 + $0x4a]]
    %s101 = sld [smem:[#allocation3 + $0x4b]]
    %s102 = sld [smem:[#allocation3 + $0x4c]]
    %s103 = sld [smem:[#allocation3 + $0x4d]]
    %s104 = sld [smem:[#allocation3 + $0x4e]]
    %s105 = sld [smem:[#allocation3 + $0x4f]]
    %s106 = sld [smem:[#allocation3 + $0x50]]
    %s107 = sld [smem:[#allocation3 + $0x51]]
    %s108 = sld [smem:[#allocation3 + $0x52]]
    %s109 = sld [smem:[#allocation3 + $0x53]]
    %s110 = sld [smem:[#allocation3 + $0x54]]
    %s111 = sld [smem:[#allocation3 + $0x55]]
    %s112 = sld [smem:[#allocation3 + $0x56]]
    %s113 = sld [smem:[#allocation3 + $0x57]]
    %s114 = sld [smem:[#allocation3 + $0x58]]
    %s115 = sld [smem:[#allocation3 + $0x59]]
    %s116 = sld [smem:[#allocation3 + $0x5a]]
    %s117 = sld [smem:[#allocation3 + $0x5b]]
    %s118 = sld [smem:[#allocation3 + $0x5c]]
    %s119 = sld [smem:[#allocation3 + $0x5d]]
    %s120 = sld [smem:[#allocation3 + $0x5e]]
    %s121 = sld [smem:[#allocation3 + $0x5f]]
    %s122 = sld [smem:[#allocation3 + $0x60]]
    %v123 = vld [vmem:[#allocation4] sm:$0xff]
    %v124 = vstv %s26
    %v125 = vmul.f32 %v124, %v123
    %v126 = vstv %s58
    %v127 = vadd.f32 %v125, %v126
    %v128 = vtanh.pop %v127
    %v129 = vstv %s90
    %v130 = vmul.f32 %v129, %v128
    %v131 = vadd.f32 %v130, 0.0
    %v132 = vstv %s27
    %v133 = vmul.f32 %v132, %v123
    %v134 = vstv %s59
    %v135 = vadd.f32 %v133, %v134
    %v136 = vtanh.pop %v135
    %v137 = vstv %s91
    %v138 = vmul.f32 %v137, %v136
    %v139 = vadd.f32 %v138, 0.0
    %v140 = vstv %s28
    %v141 = vmul.f32 %v140, %v123
    %v142 = vstv %s60
    %v143 = vadd.f32 %v141, %v142
    %v144 = vtanh.pop %v143
    %v145 = vstv %s92
    %v146 = vmul.f32 %v145, %v144
    %v147 = vadd.f32 %v146, 0.0
    %v148 = vstv %s29
    %v149 = vmul.f32 %v148, %v123
    %v150 = vstv %s61
    %v151 = vadd.f32 %v149, %v150
    %v152 = vtanh.pop %v151
    %v153 = vstv %s93
    %v154 = vmul.f32 %v153, %v152
    %v155 = vadd.f32 %v154, 0.0
    %v156 = vstv %s30
    %v157 = vmul.f32 %v156, %v123
    %v158 = vstv %s62
    %v159 = vadd.f32 %v157, %v158
    %v160 = vtanh.pop %v159
    %v161 = vstv %s94
    %v162 = vmul.f32 %v161, %v160
    %v163 = vadd.f32 %v131, %v162
    %v164 = vstv %s31
    %v165 = vmul.f32 %v164, %v123
    %v166 = vstv %s63
    %v167 = vadd.f32 %v165, %v166
    %v168 = vtanh.pop %v167
    %v169 = vstv %s95
    %v170 = vmul.f32 %v169, %v168
    %v171 = vadd.f32 %v139, %v170
    %v172 = vstv %s32
    %v173 = vmul.f32 %v172, %v123
    %v174 = vstv %s64
    %v175 = vadd.f32 %v173, %v174
    %v176 = vtanh.pop %v175
    %v177 = vstv %s96
    %v178 = vmul.f32 %v177, %v176
    %v179 = vadd.f32 %v147, %v178
    %v180 = vstv %s33
    %v181 = vmul.f32 %v180, %v123
    %v182 = vstv %s65
    %v183 = vadd.f32 %v181, %v182
    %v184 = vtanh.pop %v183
    %v185 = vstv %s97
    %v186 = vmul.f32 %v185, %v184
    %v187 = vadd.f32 %v155, %v186
    %v188 = vstv %s34
    %v189 = vmul.f32 %v188, %v123
    %v190 = vstv %s66
    %v191 = vadd.f32 %v189, %v190
    %v192 = vtanh.pop %v191
    %v193 = vstv %s98
    %v194 = vmul.f32 %v193, %v192
    %v195 = vadd.f32 %v163, %v194
    %v196 = vstv %s35
    %v197 = vmul.f32 %v196, %v123
    %v198 = vstv %s67
    %v199 = vadd.f32 %v197, %v198
    %v200 = vtanh.pop %v199
    %v201 = vstv %s99
    %v202 = vmul.f32 %v201, %v200
    %v203 = vadd.f32 %v171, %v202
    %v204 = vstv %s36
    %v205 = vmul.f32 %v204, %v123
    %v206 = vstv %s68
    %v207 = vadd.f32 %v205, %v206
    %v208 = vtanh.pop %v207
    %v209 = vstv %s100
    %v210 = vmul.f32 %v209, %v208
    %v211 = vadd.f32 %v179, %v210
    %v212 = vstv %s37
    %v213 = vmul.f32 %v212, %v123
    %v214 = vstv %s69
    %v215 = vadd.f32 %v213, %v214
    %v216 = vtanh.pop %v215
    %v217 = vstv %s101
    %v218 = vmul.f32 %v217, %v216
    %v219 = vadd.f32 %v187, %v218
    %v220 = vstv %s38
    %v221 = vmul.f32 %v220, %v123
    %v222 = vstv %s70
    %v223 = vadd.f32 %v221, %v222
    %v224 = vtanh.pop %v223
    %v225 = vstv %s102
    %v226 = vmul.f32 %v225, %v224
    %v227 = vadd.f32 %v195, %v226
    %v228 = vstv %s39
    %v229 = vmul.f32 %v228, %v123
    %v230 = vstv %s71
    %v231 = vadd.f32 %v229, %v230
    %v232 = vtanh.pop %v231
    %v233 = vstv %s103
    %v234 = vmul.f32 %v233, %v232
    %v235 = vadd.f32 %v203, %v234
    %v236 = vstv %s40
    %v237 = vmul.f32 %v236, %v123
    %v238 = vstv %s72
    %v239 = vadd.f32 %v237, %v238
    %v240 = vtanh.pop %v239
    %v241 = vstv %s104
    %v242 = vmul.f32 %v241, %v240
    %v243 = vadd.f32 %v211, %v242
    %v244 = vstv %s41
    %v245 = vmul.f32 %v244, %v123
    %v246 = vstv %s73
    %v247 = vadd.f32 %v245, %v246
    %v248 = vtanh.pop %v247
    %v249 = vstv %s105
    %v250 = vmul.f32 %v249, %v248
    %v251 = vadd.f32 %v219, %v250
    %v252 = vstv %s42
    %v253 = vmul.f32 %v252, %v123
    %v254 = vstv %s74
    %v255 = vadd.f32 %v253, %v254
    %v256 = vtanh.pop %v255
    %v257 = vstv %s106
    %v258 = vmul.f32 %v257, %v256
    %v259 = vadd.f32 %v227, %v258
    %v260 = vstv %s43
    %v261 = vmul.f32 %v260, %v123
    %v262 = vstv %s75
    %v263 = vadd.f32 %v261, %v262
    %v264 = vtanh.pop %v263
    %v265 = vstv %s107
    %v266 = vmul.f32 %v265, %v264
    %v267 = vadd.f32 %v235, %v266
    %v268 = vstv %s44
    %v269 = vmul.f32 %v268, %v123
    %v270 = vstv %s76
    %v271 = vadd.f32 %v269, %v270
    %v272 = vtanh.pop %v271
    %v273 = vstv %s108
    %v274 = vmul.f32 %v273, %v272
    %v275 = vadd.f32 %v243, %v274
    %v276 = vstv %s45
    %v277 = vmul.f32 %v276, %v123
    %v278 = vstv %s77
    %v279 = vadd.f32 %v277, %v278
    %v280 = vtanh.pop %v279
    %v281 = vstv %s109
    %v282 = vmul.f32 %v281, %v280
    %v283 = vadd.f32 %v251, %v282
    %v284 = vstv %s46
    %v285 = vmul.f32 %v284, %v123
    %v286 = vstv %s78
    %v287 = vadd.f32 %v285, %v286
    %v288 = vtanh.pop %v287
    %v289 = vstv %s110
    %v290 = vmul.f32 %v289, %v288
    %v291 = vadd.f32 %v259, %v290
    %v292 = vstv %s47
    %v293 = vmul.f32 %v292, %v123
    %v294 = vstv %s79
    %v295 = vadd.f32 %v293, %v294
    %v296 = vtanh.pop %v295
    %v297 = vstv %s111
    %v298 = vmul.f32 %v297, %v296
    %v299 = vadd.f32 %v267, %v298
    %v300 = vstv %s48
    %v301 = vmul.f32 %v300, %v123
    %v302 = vstv %s80
    %v303 = vadd.f32 %v301, %v302
    %v304 = vtanh.pop %v303
    %v305 = vstv %s112
    %v306 = vmul.f32 %v305, %v304
    %v307 = vadd.f32 %v275, %v306
    %v308 = vstv %s49
    %v309 = vmul.f32 %v308, %v123
    %v310 = vstv %s81
    %v311 = vadd.f32 %v309, %v310
    %v312 = vtanh.pop %v311
    %v313 = vstv %s113
    %v314 = vmul.f32 %v313, %v312
    %v315 = vadd.f32 %v283, %v314
    %v316 = vstv %s50
    %v317 = vmul.f32 %v316, %v123
    %v318 = vstv %s82
    %v319 = vadd.f32 %v317, %v318
    %v320 = vtanh.pop %v319
    %v321 = vstv %s114
    %v322 = vmul.f32 %v321, %v320
    %v323 = vadd.f32 %v291, %v322
    %v324 = vstv %s51
    %v325 = vmul.f32 %v324, %v123
    %v326 = vstv %s83
    %v327 = vadd.f32 %v325, %v326
    %v328 = vtanh.pop %v327
    %v329 = vstv %s115
    %v330 = vmul.f32 %v329, %v328
    %v331 = vadd.f32 %v299, %v330
    %v332 = vstv %s52
    %v333 = vmul.f32 %v332, %v123
    %v334 = vstv %s84
    %v335 = vadd.f32 %v333, %v334
    %v336 = vtanh.pop %v335
    %v337 = vstv %s116
    %v338 = vmul.f32 %v337, %v336
    %v339 = vadd.f32 %v307, %v338
    %v340 = vstv %s53
    %v341 = vmul.f32 %v340, %v123
    %v342 = vstv %s85
    %v343 = vadd.f32 %v341, %v342
    %v344 = vtanh.pop %v343
    %v345 = vstv %s117
    %v346 = vmul.f32 %v345, %v344
    %v347 = vadd.f32 %v315, %v346
    %v348 = vstv %s54
    %v349 = vmul.f32 %v348, %v123
    %v350 = vstv %s86
    %v351 = vadd.f32 %v349, %v350
    %v352 = vtanh.pop %v351
    %v353 = vstv %s118
    %v354 = vmul.f32 %v353, %v352
    %v355 = vadd.f32 %v323, %v354
    %v356 = vstv %s55
    %v357 = vmul.f32 %v356, %v123
    %v358 = vstv %s87
    %v359 = vadd.f32 %v357, %v358
    %v360 = vtanh.pop %v359
    %v361 = vstv %s119
    %v362 = vmul.f32 %v361, %v360
    %v363 = vadd.f32 %v331, %v362
    %v364 = vstv %s56
    %v365 = vmul.f32 %v364, %v123
    %v366 = vstv %s88
    %v367 = vadd.f32 %v365, %v366
    %v368 = vtanh.pop %v367
    %v369 = vstv %s120
    %v370 = vmul.f32 %v369, %v368
    %v371 = vadd.f32 %v339, %v370
    %v372 = vstv %s57
    %v373 = vmul.f32 %v372, %v123
    %v374 = vstv %s89
    %v375 = vadd.f32 %v373, %v374
    %v376 = vtanh.pop %v375
    %v377 = vstv %s121
    %v378 = vmul.f32 %v377, %v376
    %v379 = vadd.f32 %v347, %v378
    %v380 = vadd.f32 %v355, %v363
    %v381 = vadd.f32 %v380, %v371
    %v382 = vadd.f32 %v381, %v379
    %v383 = vstv %s122
    %v384 = vadd.f32 %v382, %v383
    %385 = vst [vmem:[#allocation7] sm:$0xff] %v384
    // Predicated region
    $region10: #{tpu_custom_call.1} parent=1 // pred_check
      _
    $region11: #{tpu_custom_call.1} parent=1 // pred_check_branch
      %387 = sbr.rel (0) target = $region13
    $region12: #{tpu_custom_call.1} parent=1 // pred_region
      %s389 = ssub.s32 128, 128
      %390 = vsyncadd [#allocation6], %s389
      %s392 = sshll.u32 [#allocation7], 4
      %s393 = int_to_ptr.vmem [resolvable:$true] %s392
      %395 = dma.vmem_to_hbm [thread:$0]  %s393, 128, %s2, [#allocation6]
    $region13: #{tpu_custom_call.1} parent=1 // pred_fallthru
      _
    // Predicated region
    $region14: #{tpu_custom_call.1} parent=1 // pred_check
      _
    $region15: #{tpu_custom_call.1} parent=1 // pred_check_branch
      %397 = sbr.rel (0) target = $region17
    $region16: #{tpu_custom_call.1} parent=1 // pred_region
      %398 = dma.done [#allocation6], 128
    $region17: #{tpu_custom_call.1} parent=1 // pred_fallthru
      _
    %399 = vsyncpa [#allocation5], 1
    %400 = vsyncpa [#allocation6], 1

</llo_original>
